<compile_context>
chip_gen: v6e
topology: v6e:2x2x1
jax: 0.10.0
libtpu: 0.0.40
codegen_flags: <defaults>
</compile_context>

<pallas_src>
import math

import jax
import jax.numpy as jnp
from jax.experimental import pallas as pl
from jax.experimental.pallas import tpu as pltpu

_BN_EPS = 1e-5
_NEG_INF = -1e30
_LANE = 128          # lane-dense channel padding for GCN / pooled features / fc3 / classes
_FC1_PAD = 512       # fc1 width 500 -> 512


def _vmem_spec():
    return pl.BlockSpec(memory_space=pltpu.MemorySpace.VMEM)


def _mm(a, b):
    return jnp.dot(a.astype(jnp.bfloat16), b.astype(jnp.bfloat16),
                   preferred_element_type=jnp.float32)


# ----------------------------------------------------------------------------
# Pallas kernels
# ----------------------------------------------------------------------------
def _gcn_kernel(a_ref, x_ref, w_ref, b_ref, isq_ref, o_ref):
    # Dense GCNConv row tile with normalization folded into activations:
    #   out[rows] = isq[rows] * ( A_sl[rows,:] @ (isq * (X @ W)) ) + b
    # A_sl already contains the self loops (exact 0/1 bf16), so no +I term and
    # no NxN temporaries are ever built.
    tm = o_ref.shape[0]
    isq = isq_ref[...]                                                 # [n,1] f32
    xw = _mm(x_ref[...], w_ref[...])                                   # [n,c] f32 (XW first)
    z = (xw * isq).astype(jnp.bfloat16)                                # D^-1/2 X W
    agg = jnp.dot(a_ref[...].astype(jnp.bfloat16), z,
                  preferred_element_type=jnp.float32)                  # [tm,c]
    r0 = pl.multiple_of(pl.program_id(0) * tm, tm)
    isq_rows = isq_ref[pl.ds(r0, tm), :]                               # [tm,1]
    o_ref[...] = (agg * isq_rows + b_ref[...]).astype(o_ref.dtype)


def _snp_head_kernel(x_ref, wmean_ref, w1_ref, b1_ref, g1_ref, be1_ref,
                     x1p_ref, x2p_ref, w3s_ref, w3x_ref, b3_ref,
                     g2_ref, be2_ref, w4_ref, b4_ref, o_ref):
    # Fused: Input_layer -> relu -> fc1 -> bn1 -> relu
    #        -> (in-kernel gmp/gap of pooled GCN features)
    #        -> fc3 (split over virtual concat) -> bn2 -> fc4 -> log_softmax
    z = jnp.maximum(x_ref[...] * wmean_ref[...], 0.0)

    # fc1 + BatchNorm1d (training-mode batch stats, biased variance) + relu
    h = _mm(z, w1_ref[...]) + b1_ref[...]
    mu = jnp.mean(h, axis=0, keepdims=True)
    var = jnp.mean((h - mu) ** 2, axis=0, keepdims=True)
    h = jnp.maximum((h - mu) * jax.lax.rsqrt(var + _BN_EPS) * g1_ref[...] + be1_ref[...],
                    0.0)

    # global max / mean pooling per graph, fused in-kernel (no HBM slab)
    # TODO(synk): if production batch B grows, pad B to a sublane multiple rather
    # than tiling B across a grid (bn1/bn2 batch stats need the full batch).
    x1p = x1p_ref[...].astype(jnp.float32)                             # [G, k1, C]
    x2p = x2p_ref[...].astype(jnp.float32)                             # [G, k2, C]
    g1m, g1a = jnp.max(x1p, axis=1), jnp.mean(x1p, axis=1)
    g2m, g2a = jnp.max(x2p, axis=1), jnp.mean(x2p, axis=1)

    # fc3 split over the virtual concat [snp(500) | gmp1|gap1|gmp2|gap2 (4x50)]
    f = (_mm(h, w3s_ref[...])
         + _mm(g1m, w3x_ref[0]) + _mm(g1a, w3x_ref[1])
         + _mm(g2m, w3x_ref[2]) + _mm(g2a, w3x_ref[3])
         + b3_ref[...])

    # bn2 (NO relu, matches torch) -> fc4 -> log_softmax
    mu2 = jnp.mean(f, axis=0, keepdims=True)
    var2 = jnp.mean((f - mu2) ** 2, axis=0, keepdims=True)
    fn = (f - mu2) * jax.lax.rsqrt(var2 + _BN_EPS) * g2_ref[...] + be2_ref[...]
    logits = _mm(fn, w4_ref[...]) + b4_ref[...]
    # padded class columns carry a -1e30 bias -> contribute exp(..)=0 to the lse
    m = jnp.max(logits, axis=-1, keepdims=True)
    lse = jnp.log(jnp.sum(jnp.exp(logits - m), axis=-1, keepdims=True)) + m
    o_ref[...] = logits - lse


# ----------------------------------------------------------------------------
# pallas_call wrappers
# ----------------------------------------------------------------------------
def _pick_row_tile(n):
    for tm in (512, 256, 128, 64, 32, 16):
        if n % tm == 0:
            return tm
    return n   # small / odd N: single full-array block


def _gcn_vmem_estimate(tm, n, f_in, c_out, x_itemsize):
    a_blk = 2 * tm * n * 2                                     # streamed bf16 A row block (x2 buffers)
    resident = n * f_in * x_itemsize + f_in * c_out * 4 + c_out * 4 + n * 512
    out_blk = 2 * tm * c_out * 2
    temps = n * c_out * (4 + 2) + tm * c_out * 4
    return a_blk + resident + out_blk + temps


def _vmem_limit_bytes(est):
    try:
        cap = int(pltpu.get_tpu_info().vmem_capacity_bytes)
    except Exception:
        cap = 64 * 1024 * 1024                                 # v7x floor
    return int(min(max(2 * est, 32 * 1024 * 1024), cap - 4 * 1024 * 1024))


def gcn_conv(a_sl, x, w, b, inv_sqrt):
    """a_sl: [n,n] bf16 adjacency WITH self loops (exact 0/1); inv_sqrt: [n,1] f32."""
    n, f_in = x.shape
    c_out = w.shape[1]
    tm = _pick_row_tile(n)
    est = _gcn_vmem_estimate(tm, n, f_in, c_out, x.dtype.itemsize)
    # TODO(synk): for very large N, precompute z = isq*(X@W) once (scratch / tiny
    # separate matmul) instead of recomputing per row tile, and consider int8 HBM
    # storage of the adjacency for a further 2x DMA saving.
    return pl.pallas_call(
        _gcn_kernel,
        out_shape=jax.ShapeDtypeStruct((n, c_out), jnp.bfloat16),
        grid=(n // tm,),
        in_specs=[
            pl.BlockSpec((tm, n), lambda i: (i, 0)),           # adjacency row block (streamed)
            pl.BlockSpec((n, f_in), lambda i: (0, 0)),         # X (resident)
            pl.BlockSpec((f_in, c_out), lambda i: (0, 0)),     # W (resident)
            pl.BlockSpec((1, c_out), lambda i: (0, 0)),        # bias (resident)
            pl.BlockSpec((n, 1), lambda i: (0, 0)),            # D^-1/2 (resident)
        ],
        out_specs=pl.BlockSpec((tm, c_out), lambda i: (i, 0)),
        compiler_params=pltpu.CompilerParams(
            dimension_semantics=("parallel",),
            vmem_limit_bytes=_vmem_limit_bytes(est)),
    )(a_sl, x, w, b, inv_sqrt)


def snp_head(x_snp, x1p3, x2p3, pp):
    B = x_snp.shape[0]
    out_pad = pl.pallas_call(
        _snp_head_kernel,
        out_shape=jax.ShapeDtypeStruct((B, _LANE), jnp.float32),
        in_specs=[_vmem_spec()] * 15,
        out_specs=_vmem_spec(),
    )(x_snp, pp['w_mean'], pp['fc1_w'], pp['fc1_b'], pp['bn1_g'], pp['bn1_b'],
      x1p3, x2p3, pp['fc3_w_snp'], pp['fc3_w_xx'], pp['fc3_b'],
      pp['bn2_g'], pp['bn2_b'], pp['fc4_w'], pp['fc4_b'])
    return out_pad[:, :pp['num_classes']]


# ----------------------------------------------------------------------------
# Graph glue (JAX): TopK pooling (data-dependent)
# ----------------------------------------------------------------------------
def topk_pool(h, a_sl, p_unit, ratio, num_graphs, nodes_per_graph):
    # TODO(synk): general TopKPooling over ragged/sparse graphs is data-dependent;
    # this assumes equal-sized, contiguously batched graphs (as built in __main__).
    # For large N the double gather below should become scalar-prefetched row
    # gathering inside the next gcn_conv (PrefetchScalarGridSpec + pl.Element).
    score = jnp.tanh(jnp.dot(h.astype(jnp.float32), p_unit))          # [num_nodes]
    k = int(math.ceil(ratio * nodes_per_graph))
    _, idx = jax.lax.top_k(score.reshape(num_graphs, nodes_per_graph), k)
    perm = (idx + jnp.arange(num_graphs)[:, None] * nodes_per_graph).reshape(-1)
    h_p = (h[perm].astype(jnp.float32) * score[perm][:, None]).astype(jnp.bfloat16)
    a_p = a_sl[perm][:, perm]          # self-loop diagonal survives the gather
    return h_p, a_p, k


# ----------------------------------------------------------------------------
# Full forward pass
# ----------------------------------------------------------------------------
def feature_selection_gnn_forward(pp, x_nodes, a_sl, x_snp,
                                  num_graphs, nodes_per_graph, pooling_ratio=0.5):
    # a_sl: bf16 adjacency with self loops already on the diagonal (exact 0/1).
    # D^-1/2 needs full-column visibility, so the O(N) degree vector is computed
    # here (row-tiled kernel blocks cannot see all columns of A).
    isq0 = jax.lax.rsqrt(jnp.sum(a_sl, axis=1, keepdims=True, dtype=jnp.float32))
    x1 = gcn_conv(a_sl, x_nodes, pp['gcn1_w'], pp['gcn1_b'], isq0)       # [N,128] bf16
    x1p, a1, k1 = topk_pool(x1, a_sl, pp['pool1_p'], pooling_ratio,
                            num_graphs, nodes_per_graph)
    isq1 = jax.lax.rsqrt(jnp.sum(a1, axis=1, keepdims=True, dtype=jnp.float32))
    x2 = gcn_conv(a1, x1p, pp['gcn2_w'], pp['gcn2_b'], isq1)
    x2p, _, k2 = topk_pool(x2, a1, pp['pool2_p'], pooling_ratio, num_graphs, k1)

    g = num_graphs
    x1p3 = x1p.reshape(g, k1, x1p.shape[-1])     # metadata reshape; gmp/gap in-kernel
    x2p3 = x2p.reshape(g, k2, x2p.shape[-1])
    return snp_head(x_snp, x1p3, x2p3, pp)       # [B, num_classes]


# ----------------------------------------------------------------------------
# Parameters: deterministic init (unpadded, module semantics) + one-time padding
# ----------------------------------------------------------------------------
def init_params(key, num_features, num_classes, n_QT, n_snp):
    keys = jax.random.split(key, 8)
    C = 50  # conv1_out_channels == conv2_out_channels == fc3_out == 50

    def lin(k, fan_in, fan_out):
        bound = 1.0 / math.sqrt(fan_in)
        kw, kb = jax.random.split(k)
        w = jax.random.uniform(kw, (fan_in, fan_out), jnp.float32, -bound, bound)
        b = jax.random.uniform(kb, (1, fan_out), jnp.float32, -bound, bound)
        return w, b

    p = {}
    p['gcn1_w'], p['gcn1_b'] = lin(keys[0], num_features, C)
    p['gcn2_w'], p['gcn2_b'] = lin(keys[1], C, C)
    p['pool1_p'] = jax.random.normal(keys[2], (C,), jnp.float32)
    p['pool2_p'] = jax.random.normal(keys[3], (C,), jnp.float32)
    # Input_layer weights [n_QT, n_snp] (leading 1 dim squeezed), kaiming-normal style
    p['snp_w'] = jax.random.normal(keys[4], (n_QT, n_snp), jnp.float32) * math.sqrt(2.0 / n_snp)
    p['fc1_w'], p['fc1_b'] = lin(keys[5], n_snp, 500)
    p['bn1_g'] = jnp.ones((1, 500), jnp.float32)
    p['bn1_b'] = jnp.zeros((1, 500), jnp.float32)
    p['fc3_w'], p['fc3_b'] = lin(keys[6], 700, C)          # 700 = 500 (snp) + 4*50 (graph)
    p['bn2_g'] = jnp.ones((1, C), jnp.float32)
    p['bn2_b'] = jnp.zeros((1, C), jnp.float32)
    p['fc4_w'], p['fc4_b'] = lin(keys[7], C, num_classes)
    return p


def _pad_cols(x, new_cols, fill=0.0):
    return jnp.pad(x, ((0, 0), (0, new_cols - x.shape[-1])), constant_values=fill)


def _pad_rows(x, new_rows):
    return jnp.pad(x, ((0, new_rows - x.shape[0]), (0, 0)))


def prepare_params(p):
    """One-time lane padding + parameter-only precompute (hoisted out of kernels)."""
    C = p['gcn1_w'].shape[1]          # 50
    FC1 = p['fc1_w'].shape[1]         # 500
    pp = {}
    # GCN layers: pad output channels 50 -> 128 (zero cols); gcn2 also pads input rows.
    pp['gcn1_w'] = _pad_cols(p['gcn1_w'], _LANE)
    pp['gcn1_b'] = _pad_cols(p['gcn1_b'], _LANE)
    pp['gcn2_w'] = _pad_cols(_pad_rows(p['gcn2_w'], _LANE), _LANE)
    pp['gcn2_b'] = _pad_cols(p['gcn2_b'], _LANE)
    # TopK projection: pre-normalized (||p|| hoisted) + zero-padded channels.
    pp['pool1_p'] = jnp.pad(p['pool1_p'] / jnp.linalg.norm(p['pool1_p']), (0, _LANE - C))
    pp['pool2_p'] = jnp.pad(p['pool2_p'] / jnp.linalg.norm(p['pool2_p']), (0, _LANE - C))
    # Input_layer: weights.mean(dim=QT) is parameter-only -> precompute once.
    pp['w_mean'] = jnp.mean(p['snp_w'], axis=0, keepdims=True)        # [1, n_snp]
    # fc1 / bn1 padded 500 -> 512; padded columns stay exactly zero through bn+relu.
    pp['fc1_w'] = _pad_cols(p['fc1_w'], _FC1_PAD)
    pp['fc1_b'] = _pad_cols(p['fc1_b'], _FC1_PAD)
    pp['bn1_g'] = _pad_cols(p['bn1_g'], _FC1_PAD)
    pp['bn1_b'] = _pad_cols(p['bn1_b'], _FC1_PAD)
    # fc3 split: rows [0:500] act on snp features, rows [500:700] on the pooled graph
    # slabs (gmp(x1)|gap(x1)|gmp(x2)|gap(x2)); input AND output lane-padded to 128.
    w3 = p['fc3_w']
    pp['fc3_w_snp'] = _pad_cols(_pad_rows(w3[:FC1], _FC1_PAD), _LANE)       # [512,128]
    w3_xx = w3[FC1:].reshape(4, C, C)
    pp['fc3_w_xx'] = jnp.zeros((4, _LANE, _LANE), w3.dtype).at[:, :C, :C].set(w3_xx)
    pp['fc3_b'] = _pad_cols(p['fc3_b'], _LANE)
    pp['bn2_g'] = _pad_cols(p['bn2_g'], _LANE)     # padded gamma = 0 keeps pad cols at 0
    pp['bn2_b'] = _pad_cols(p['bn2_b'], _LANE)
    # fc4: rows 50->128 (zeros) and classes 4->128; padded logits get -1e30 bias so
    # the log_softmax over the real classes is unchanged.
    pp['fc4_w'] = _pad_cols(_pad_rows(p['fc4_w'], _LANE), _LANE)
    pp['fc4_b'] = _pad_cols(p['fc4_b'], _LANE, fill=_NEG_INF)
    pp['num_classes'] = p['fc4_w'].shape[1]
    return pp


# ----------------------------------------------------------------------------
if __name__ == "__main__":
    # Small shapes consistent with the module
    NUM_FEATURES = 16      # node feature dim
    NUM_CLASSES = 4
    N_QT = 4
    N_SNP = 256
    POOL_RATIO = 0.5
    G, N = 2, 16           # 2 graphs, 16 nodes each (batch = 2)

    key = jax.random.PRNGKey(0)
    k_params, k_x, k_snp = jax.random.split(key, 3)
    params = init_params(k_params, NUM_FEATURES, NUM_CLASSES, N_QT, N_SNP)
    pp = prepare_params(params)   # one-time lane padding + parameter precompute

    # Build batched ring graphs -> edge_index -> dense symmetric adjacency.
    src, dst = [], []
    for g in range(G):
        base = g * N
        for i in range(N):
            u, v = base + i, base + (i + 1) % N
            src += [u, v]
            dst += [v, u]
    edge_index = jnp.array([src, dst], dtype=jnp.int32)            # [2, E]
    A = jnp.zeros((G * N, G * N), jnp.float32).at[edge_index[0], edge_index[1]].set(1.0)
    # Self loops added once here (GCN normalization); values are exactly {0,1},
    # so the bf16 storage is lossless and halves the N^2 HBM/MXU operand traffic.
    A_sl = (A + jnp.eye(G * N, dtype=jnp.float32)).astype(jnp.bfloat16)

    x_nodes = jax.random.normal(k_x, (G * N, NUM_FEATURES), jnp.float32)
    x_snp = jax.random.normal(k_snp, (G, N_SNP), jnp.float32)      # batch = G = 2

    cls = feature_selection_gnn_forward(pp, x_nodes, A_sl, x_snp, G, N, POOL_RATIO)
    cls = jax.block_until_ready(cls)
    assert cls.shape == (G, NUM_CLASSES)
    assert bool(jnp.all(jnp.isfinite(cls)))
    print("KERNEL_OK")
</pallas_src>

<mosaic_0001>
module attributes {stable_mosaic.version = 11 : i64} {
  func.func @_gcn_kernel(%arg0: i32, %arg1: memref<32x32xbf16, #tpu.memory_space<vmem>>, %arg2: memref<32x16xf32, #tpu.memory_space<vmem>>, %arg3: memref<16x128xf32, #tpu.memory_space<vmem>>, %arg4: memref<1x128xf32, #tpu.memory_space<vmem>>, %arg5: memref<32x1xf32, #tpu.memory_space<vmem>>, %arg6: memref<32x128xbf16, #tpu.memory_space<vmem>>) attributes {dimension_semantics = [#tpu.dimension_semantics<parallel>], iteration_bounds = array<i64: 1>, scalar_prefetch = 0 : i64, scratch_operands = 0 : i64, tpu.core_type = #tpu.core_type<tc>, window_params = [{transform_indices = @transform_0, window_bounds = array<i64: 32, 32>}, {pipeline_mode = #tpu.pipeline_mode<synchronous>, transform_indices = @transform_1, window_bounds = array<i64: 32, 16>}, {pipeline_mode = #tpu.pipeline_mode<synchronous>, transform_indices = @transform_2, window_bounds = array<i64: 16, 128>}, {pipeline_mode = #tpu.pipeline_mode<synchronous>, transform_indices = @transform_3, window_bounds = array<i64: 1, 128>}, {pipeline_mode = #tpu.pipeline_mode<synchronous>, transform_indices = @transform_4, window_bounds = array<i64: 32, 1>}, {transform_indices = @transform_5, window_bounds = array<i64: 32, 128>}]} {
    %c0 = arith.constant 0 : index
    %c0_0 = arith.constant 0 : index
    %0 = vector.load %arg5[%c0, %c0_0] : memref<32x1xf32, #tpu.memory_space<vmem>>, vector<32x1xf32>
    %c0_1 = arith.constant 0 : index
    %c0_2 = arith.constant 0 : index
    %1 = vector.load %arg2[%c0_1, %c0_2] : memref<32x16xf32, #tpu.memory_space<vmem>>, vector<32x16xf32>
    %c0_3 = arith.constant 0 : index
    %c0_4 = arith.constant 0 : index
    %2 = vector.load %arg3[%c0_3, %c0_4] : memref<16x128xf32, #tpu.memory_space<vmem>>, vector<16x128xf32>
    %3 = arith.truncf %1 : vector<32x16xf32> to vector<32x16xbf16>
    %4 = arith.truncf %2 : vector<16x128xf32> to vector<16x128xbf16>
    %cst = arith.constant dense<0.000000e+00> : vector<32x128xf32>
    %5 = tpu.matmul %3, %4, %cst {dimension_numbers = #tpu.dot_dimension_numbers<[1], [0], [0], [1], [0, 0, 1, 1], [], []>} : vector<32x16xbf16>, vector<16x128xbf16>, vector<32x128xf32> -> vector<32x128xf32>
    %6 = vector.broadcast %0 : vector<32x1xf32> to vector<32x128xf32>
    %7 = arith.mulf %5, %6 : vector<32x128xf32>
    %8 = arith.truncf %7 : vector<32x128xf32> to vector<32x128xbf16>
    %c0_5 = arith.constant 0 : index
    %c0_6 = arith.constant 0 : index
    %9 = vector.load %arg1[%c0_5, %c0_6] : memref<32x32xbf16, #tpu.memory_space<vmem>>, vector<32x32xbf16>
    %cst_7 = arith.constant dense<0.000000e+00> : vector<32x128xf32>
    %10 = tpu.matmul %9, %8, %cst_7 {dimension_numbers = #tpu.dot_dimension_numbers<[1], [0], [0], [1], [0, 0, 1, 1], [], []>} : vector<32x32xbf16>, vector<32x128xbf16>, vector<32x128xf32> -> vector<32x128xf32>
    %c32_i32 = arith.constant 32 : i32
    %11 = arith.muli %arg0, %c32_i32 : i32
    %12 = tpu.assume_multiple %11, 32 : i32
    %13 = arith.index_cast %12 : i32 to index
    %c0_8 = arith.constant 0 : index
    %14 = vector.load %arg5[%13, %c0_8] : memref<32x1xf32, #tpu.memory_space<vmem>>, vector<32x1xf32>
    %15 = vector.broadcast %14 : vector<32x1xf32> to vector<32x128xf32>
    %16 = arith.mulf %10, %15 : vector<32x128xf32>
    %c0_9 = arith.constant 0 : index
    %c0_10 = arith.constant 0 : index
    %17 = vector.load %arg4[%c0_9, %c0_10] : memref<1x128xf32, #tpu.memory_space<vmem>>, vector<1x128xf32>
    %18 = vector.broadcast %17 : vector<1x128xf32> to vector<32x128xf32>
    %19 = arith.addf %16, %18 : vector<32x128xf32>
    %20 = arith.truncf %19 : vector<32x128xf32> to vector<32x128xbf16>
    %c0_11 = arith.constant 0 : index
    %c0_12 = arith.constant 0 : index
    %21 = vector.load %arg6[%c0_11, %c0_12] : memref<32x128xbf16, #tpu.memory_space<vmem>>, vector<32x128xbf16>
    tpu.vector_store %arg6[%c0_11, %c0_12], %20 {strides = array<i32>} : memref<32x128xbf16, #tpu.memory_space<vmem>>, vector<32x128xbf16>,
    return
  }
  func.func @transform_0(%arg0: i32) -> (i32, i32) {
    %c0_i32 = arith.constant 0 : i32
    %c0_i32_0 = arith.constant 0 : i32
    return %arg0, %c0_i32 : i32, i32
  }
  func.func @transform_1(%arg0: i32) -> (i32, i32) {
    %c0_i32 = arith.constant 0 : i32
    %c0_i32_0 = arith.constant 0 : i32
    %c0_i32_1 = arith.constant 0 : i32
    return %c0_i32, %c0_i32_0 : i32, i32
  }
  func.func @transform_2(%arg0: i32) -> (i32, i32) {
    %c0_i32 = arith.constant 0 : i32
    %c0_i32_0 = arith.constant 0 : i32
    %c0_i32_1 = arith.constant 0 : i32
    return %c0_i32, %c0_i32_0 : i32, i32
  }
  func.func @transform_3(%arg0: i32) -> (i32, i32) {
    %c0_i32 = arith.constant 0 : i32
    %c0_i32_0 = arith.constant 0 : i32
    %c0_i32_1 = arith.constant 0 : i32
    return %c0_i32, %c0_i32_0 : i32, i32
  }
  func.func @transform_4(%arg0: i32) -> (i32, i32) {
    %c0_i32 = arith.constant 0 : i32
    %c0_i32_0 = arith.constant 0 : i32
    %c0_i32_1 = arith.constant 0 : i32
    return %c0_i32, %c0_i32_0 : i32, i32
  }
  func.func @transform_5(%arg0: i32) -> (i32, i32) {
    %c0_i32 = arith.constant 0 : i32
    %c0_i32_0 = arith.constant 0 : i32
    return %arg0, %c0_i32 : i32, i32
  }
}

</mosaic_0001>

<llo_original>
// kernel: tpu_custom_call.1
$region0: #{tpu_custom_call.1}
  #allocation0 [shape = 'u32[]', space=smem, size = 0x4, offset = 0x4, fixed_abs, tag = 'smem constant byte address 0x4 - core index']
  #allocation1 [shape = 'u32[144,128]{1,0:T(1,128)}', space=vmem, size = 0x12000, scoped, tag = 'internal scratch']
  %s0 = inlined_call_operand.vmem [shape: bf16[32,32], index: 0, kind: input, shape index: {}]
  %s1 = inlined_call_operand.vmem [shape: f32[32,16], index: 1, kind: input, shape index: {}]
  %s2 = inlined_call_operand.vmem [shape: f32[16,128], index: 2, kind: input, shape index: {}]
  %s3 = inlined_call_operand.vmem [shape: f32[1,128], index: 3, kind: input, shape index: {}]
  %s4 = inlined_call_operand.vmem [shape: f32[32,1], index: 4, kind: input, shape index: {}]
  %s5 = inlined_call_operand.hbm [shape: bf16[32,128], index: 5, kind: output, shape index: {}]
  %s6 = sld [smem:[#allocation0]]
  $region30: #{tpu_custom_call.1} parent=0
    _
  %s8 = ssub.s32 1, %s6
  %s9 = scalar_select 0, %s8, %s6
  $region1: #{tpu_custom_call.1} parent=0
    #allocation2 [shape = 'u8[8192]{0}', space=vmem, size = 0x2000, scoped, tag = 'output window, operand 0, single buffered']
    #allocation3 [shape = 's32[1]{0}', space=sflag, size = 0x4, scoped, tag = 'scoped memory for tpu_custom_call.1']
    %10 = vsyncpa [#allocation3], 0
    // Predicated region
    $region2: #{tpu_custom_call.1} parent=1 // pred_check
      _
    $region3: #{tpu_custom_call.1} parent=1 // pred_check_branch
      %12 = sbr.rel (0) target = $region5
    $region4: #{tpu_custom_call.1} parent=1 // pred_region
      _
    $region5: #{tpu_custom_call.1} parent=1 // pred_fallthru
      _
    // Predicated region
    $region6: #{tpu_custom_call.1} parent=1 // pred_check
      _
    $region7: #{tpu_custom_call.1} parent=1 // pred_check_branch
      %14 = sbr.rel (0) target = $region9
    $region8: #{tpu_custom_call.1} parent=1 // pred_region
      _
    $region9: #{tpu_custom_call.1} parent=1 // pred_fallthru
      _
    // Predicated region
    $region10: #{tpu_custom_call.1} parent=1 // pred_check
      _
    $region11: #{tpu_custom_call.1} parent=1 // pred_check_branch
      %16 = sbr.rel (0) target = $region13
    $region12: #{tpu_custom_call.1} parent=1 // pred_region
      _
    $region13: #{tpu_custom_call.1} parent=1 // pred_fallthru
      _
    // Predicated region
    $region14: #{tpu_custom_call.1} parent=1 // pred_check
      _
    $region15: #{tpu_custom_call.1} parent=1 // pred_check_branch
      %18 = sbr.rel (0) target = $region17
    $region16: #{tpu_custom_call.1} parent=1 // pred_region
      _
    $region17: #{tpu_custom_call.1} parent=1 // pred_fallthru
      _
    // Predicated region
    $region18: #{tpu_custom_call.1} parent=1 // pred_check
      _
    $region19: #{tpu_custom_call.1} parent=1 // pred_check_branch
      %20 = sbr.rel (0) target = $region21
    $region20: #{tpu_custom_call.1} parent=1 // pred_region
      _
    $region21: #{tpu_custom_call.1} parent=1 // pred_fallthru
      _
    %v22 = vld [vmem:[%s4] sm:$0xff]
    %v23 = vld [vmem:[%s4 + $0x8] sm:$0xff]
    %v24 = vld [vmem:[%s4 + $0x10] sm:$0xff]
    %v25 = vld [vmem:[%s4 + $0x18] sm:$0xff]
    %v26 = vld [vmem:[%s1] sm:$0xff]
    %v27 = vld [vmem:[%s1 + $0x8] sm:$0xff]
    %v28 = vld [vmem:[%s1 + $0x10] sm:$0xff]
    %v29 = vld [vmem:[%s1 + $0x18] sm:$0xff]
    %v30 = vld [vmem:[%s2] sm:$0xff]
    %v31 = vld [vmem:[%s2 + $0x8] sm:$0xff]
    %v32 = vpack.c.bf16 %v27, %v26
    %v33 = vpack.c.bf16 %v29, %v28
    %v34 = vpack.c.bf16 %v31, %v30
    %vm35 = vcmask 130048
    %v37 = vsel %vm35, %v32, 0
    %v40 = vsel %vm35, %v33, 0
    %42 = vmatprep.subr.bf16.mxu0 0
    %43 = vmatpush1.bf16.msra.mxu0 0
    %44 = vmatprep.subr.bf16.mxu0 0
    %45 = vmatpush1.bf16.msra.mxu0 0
    %46 = vmatprep.subr.bf16.mxu0 0
    %47 = vmatpush1.bf16.msra.mxu0 0
    %48 = vmatprep.subr.bf16.mxu0 0
    %49 = vmatpush1.bf16.msra.mxu0 0
    %50 = vmatprep.subr.bf16.mxu0 0
    %51 = vmatpush1.bf16.msra.mxu0 0
    %52 = vmatprep.subr.bf16.mxu0 0
    %53 = vmatpush1.bf16.msra.mxu0 0
    %54 = vmatprep.subr.bf16.mxu0 0
    %55 = vmatpush1.bf16.msra.mxu0 0
    %56 = vmatprep.subr.bf16.mxu0 0
    %57 = vmatpush1.bf16.msra.mxu0 %v34
    %58 = vmatprep.subr.bf16.mxu0 0
    %59 = vmatpush2.bf16.msra.mxu0 0
    %60 = vmatprep.subr.bf16.mxu0 0
    %61 = vmatpush2.bf16.msra.mxu0 0
    %62 = vmatprep.subr.bf16.mxu0 0
    %63 = vmatpush2.bf16.msra.mxu0 0
    %64 = vmatprep.subr.bf16.mxu0 0
    %65 = vmatpush2.bf16.msra.mxu0 0
    %66 = vmatprep.subr.bf16.mxu0 0
    %67 = vmatpush2.bf16.msra.mxu0 0
    %68 = vmatprep.subr.bf16.mxu0 0
    %69 = vmatpush2.bf16.msra.mxu0 0
    %70 = vmatprep.subr.bf16.mxu0 0
    %71 = vmatpush2.bf16.msra.mxu0 0
    %72 = vmatprep.subr.bf16.mxu0 0
    %73 = vmatpush2.bf16.msra.mxu0 0
    %74 = vmatprep.mubr.bf16.mxu0 0
    %75 = vmatmul.mubr.bf16.gmra.mxu0 %v37
    %v76 = vpop.f32.mrf.mxu0
    %v77 = vadd.f32 0.0, %v76
    %v78 = vpop.f32.mrf.mxu0
    %v79 = vpop.f32.mrf.mxu0
    %v80 = vadd.f32 0.0, %v79
    %v81 = vpop.f32.mrf.mxu0
    %82 = vmatprep.mubr.bf16.mxu0 0
    %83 = vmatmul.mubr.bf16.gmra.mxu0 %v40
    %v84 = vpop.f32.mrf.mxu0
    %v85 = vadd.f32 0.0, %v84
    %v86 = vpop.f32.mrf.mxu0
    %v87 = vpop.f32.mrf.mxu0
    %v88 = vadd.f32 0.0, %v87
    %v89 = vpop.f32.mrf.mxu0
    %90 = vdwg.mxu0
    %92 = vset.pattern.permute.xlu0 0
    %93 = vperm.xlu0 %92, %v22
    %v94 = vpop.permute.xlu0 %93
    %97 = vset.pattern.permute.xlu0 0
    %98 = vperm.xlu0 %97, %v23
    %v99 = vpop.permute.xlu0 %98
    %102 = vset.pattern.permute.xlu0 0
    %103 = vperm.xlu0 %102, %v24
    %v104 = vpop.permute.xlu0 %103
    %107 = vset.pattern.permute.xlu0 0
    %108 = vperm.xlu0 %107, %v25
    %v109 = vpop.permute.xlu0 %108
    %v111 = vmul.f32 %v77, %v94
    %v112 = vmul.f32 %v80, %v99
    %v113 = vmul.f32 %v85, %v104
    %v114 = vmul.f32 %v88, %v109
    %v115 = vpack.c.bf16 %v112, %v111
    %v116 = vpack.c.bf16 %v114, %v113
    %v117 = vld [vmem:[%s0] sm:$0xf]
    %v118 = vld [vmem:[%s0 + $0x4] sm:$0xf]
    %v119 = vld [vmem:[%s0 + $0x8] sm:$0xf]
    %v120 = vld [vmem:[%s0 + $0xc] sm:$0xf]
    %v125 = vunpack.c.l.b16 %v117
    %v126 = vunpack.c.l.b16 %v118
    %v127 = vunpack.c.l.b16 %v119
    %v128 = vunpack.c.l.b16 %v120
    %v129 = vpack.c.b16 %v126, %v125
    %v130 = vpack.c.b16 %v128, %v127
    %vm131 = vcmask 261120
    %v133 = vsel %vm131, %v129, 0
    %v136 = vsel %vm131, %v130, 0
    %138 = vmatprep.subr.bf16.mxu0 0
    %139 = vmatpush1.bf16.msra.mxu0 0
    %140 = vmatprep.subr.bf16.mxu0 0
    %141 = vmatpush1.bf16.msra.mxu0 0
    %142 = vmatprep.subr.bf16.mxu0 0
    %143 = vmatpush1.bf16.msra.mxu0 0
    %144 = vmatprep.subr.bf16.mxu0 0
    %145 = vmatpush1.bf16.msra.mxu0 0
    %146 = vmatprep.subr.bf16.mxu0 0
    %147 = vmatpush1.bf16.msra.mxu0 0
    %148 = vmatprep.subr.bf16.mxu0 0
    %149 = vmatpush1.bf16.msra.mxu0 0
    %150 = vmatprep.subr.bf16.mxu0 0
    %151 = vmatpush1.bf16.msra.mxu0 %v116
    %152 = vmatprep.subr.bf16.mxu0 0
    %153 = vmatpush1.bf16.msra.mxu0 %v115
    %154 = vmatprep.subr.bf16.mxu0 0
    %155 = vmatpush2.bf16.msra.mxu0 0
    %156 = vmatprep.subr.bf16.mxu0 0
    %157 = vmatpush2.bf16.msra.mxu0 0
    %158 = vmatprep.subr.bf16.mxu0 0
    %159 = vmatpush2.bf16.msra.mxu0 0
    %160 = vmatprep.subr.bf16.mxu0 0
    %161 = vmatpush2.bf16.msra.mxu0 0
    %162 = vmatprep.subr.bf16.mxu0 0
    %163 = vmatpush2.bf16.msra.mxu0 0
    %164 = vmatprep.subr.bf16.mxu0 0
    %165 = vmatpush2.bf16.msra.mxu0 0
    %166 = vmatprep.subr.bf16.mxu0 0
    %167 = vmatpush2.bf16.msra.mxu0 0
    %168 = vmatprep.subr.bf16.mxu0 0
    %169 = vmatpush2.bf16.msra.mxu0 0
    %170 = vmatprep.mubr.bf16.mxu0 0
    %171 = vmatmul.mubr.bf16.gmra.mxu0 %v133
    %v172 = vpop.f32.mrf.mxu0
    %v173 = vadd.f32 0.0, %v172
    %v174 = vpop.f32.mrf.mxu0
    %v175 = vpop.f32.mrf.mxu0
    %v176 = vadd.f32 0.0, %v175
    %v177 = vpop.f32.mrf.mxu0
    %178 = vmatprep.mubr.bf16.mxu0 0
    %179 = vmatmul.mubr.bf16.gmra.mxu0 %v136
    %v180 = vpop.f32.mrf.mxu0
    %v181 = vadd.f32 0.0, %v180
    %v182 = vpop.f32.mrf.mxu0
    %v183 = vpop.f32.mrf.mxu0
    %v184 = vadd.f32 0.0, %v183
    %v185 = vpop.f32.mrf.mxu0
    %186 = vdwg.mxu0
    %s187 = smul.u32 0, 32
    %s188 = scalar_lea.vmem %s4, %s187
    %v189 = vld [vmem:[%s188] sm:$0xff]
    %v190 = vld [vmem:[%s188 + $0x8] sm:$0xff]
    %v191 = vld [vmem:[%s188 + $0x10] sm:$0xff]
    %v192 = vld [vmem:[%s188 + $0x18] sm:$0xff]
    %194 = vset.pattern.permute.xlu0 0
    %195 = vperm.xlu0 %194, %v189
    %v196 = vpop.permute.xlu0 %195
    %199 = vset.pattern.permute.xlu0 0
    %200 = vperm.xlu0 %199, %v190
    %v201 = vpop.permute.xlu0 %200
    %204 = vset.pattern.permute.xlu0 0
    %205 = vperm.xlu0 %204, %v191
    %v206 = vpop.permute.xlu0 %205
    %209 = vset.pattern.permute.xlu0 0
    %210 = vperm.xlu0 %209, %v192
    %v211 = vpop.permute.xlu0 %210
    %v213 = vmul.f32 %v173, %v196
    %v214 = vmul.f32 %v176, %v201
    %v215 = vmul.f32 %v181, %v206
    %v216 = vmul.f32 %v184, %v211
    %v217 = vld [vmem:[%s3] sm:$0x1]
    %v219 = vlaneseq
    %v220 = vshrl.u32 %v219, 7
    %v221 = vsub.s32 0, %v220
    %v222 = vrot.slane %v217, %v221
    %v224 = vadd.f32 %v213, %v222
    %v225 = vadd.f32 %v214, %v222
    %v226 = vadd.f32 %v215, %v222
    %v227 = vadd.f32 %v216, %v222
    %v228 = vpack.c.bf16 %v225, %v224
    %v229 = vpack.c.bf16 %v227, %v226
    %v232 = vunpack.c.l.b16 %v228
    %v233 = vunpack.c.h.b16 %v228
    %v234 = vunpack.c.l.b16 %v229
    %v235 = vunpack.c.h.b16 %v229
    %v236 = vpack.c.b16 %v232, %v232
    %v237 = vpack.c.b16 %v233, %v233
    %v238 = vpack.c.b16 %v234, %v234
    %v239 = vpack.c.b16 %v235, %v235
    %244 = vst [vmem:[#allocation2] sm:$0xf] %v236
    %245 = vst [vmem:[#allocation2 + $0x4] sm:$0xf] %v237
    %246 = vst [vmem:[#allocation2 + $0x8] sm:$0xf] %v238
    %247 = vst [vmem:[#allocation2 + $0xc] sm:$0xf] %v239
    // Predicated region
    $region22: #{tpu_custom_call.1} parent=1 // pred_check
      _
    $region23: #{tpu_custom_call.1} parent=1 // pred_check_branch
      %249 = sbr.rel (0) target = $region25
    $region24: #{tpu_custom_call.1} parent=1 // pred_region
      %s251 = ssub.s32 256, 256
      %252 = vsyncadd [#allocation3], %s251
      %s253 = sshll.u32 [#allocation2], 4
      %s254 = int_to_ptr.vmem [resolvable:$true] %s253
      %259 = dma.vmem_to_hbm [thread:$0]  %s254, 256, %s5, [#allocation3], 64, 64, 4
    $region25: #{tpu_custom_call.1} parent=1 // pred_fallthru
      _
    // Predicated region
    $region26: #{tpu_custom_call.1} parent=1 // pred_check
      _
    $region27: #{tpu_custom_call.1} parent=1 // pred_check_branch
      %261 = sbr.rel (0) target = $region29
    $region28: #{tpu_custom_call.1} parent=1 // pred_region
      %262 = dma.done [#allocation3], 256
    $region29: #{tpu_custom_call.1} parent=1 // pred_fallthru
      _
    %263 = vsyncpa [#allocation3], 1

</llo_original>
